<compile_context>
chip_gen: v6e
topology: v6e:2x2x1
jax: 0.10.0
libtpu: 0.0.40
codegen_flags: <defaults>
</compile_context>

<pallas_src>
import functools

import jax
import jax.numpy as jnp
from jax.experimental import pallas as pl
from jax.experimental.pallas import tpu as pltpu


def _normalize_kernel(scale_ref, bias_ref, x_ref, o_ref, *, tr, resident):
    if resident:
        # scale/bias hold every row (fetched once, kept in VMEM); slice this
        # grid step's row window.  tr is a multiple of the sublane packing.
        start = pl.multiple_of(pl.program_id(0) * tr, tr)
        scale = scale_ref[pl.ds(start, tr), :]
        bias = bias_ref[pl.ds(start, tr), :]
    else:
        scale = scale_ref[...]
        bias = bias_ref[...]
    x = x_ref[...].astype(jnp.float32)
    o_ref[...] = (x * scale + bias).astype(o_ref.dtype)


def _choose_tiles(rows, lanes, in_itemsize, out_itemsize):
    """Pick (tr, tl): ~1 MiB blocks, >=8 (even) grid steps, packed sublanes."""
    # Sublane packing: 8 rows for 4-byte, 16 for 2-byte, 32 for 1-byte dtypes.
    pack = 8 * max(1, 4 // min(in_itemsize, out_itemsize))
    target = 1 << 20                                   # ~1 MiB per x block
    itemsize = max(in_itemsize, out_itemsize)
    row_bytes = lanes * itemsize

    if pack * row_bytes > 2 * target:
        # Very wide rows: one packed row group per step, split the lane axis.
        tr = min(pack, rows)
        tl = max(128, (target // (tr * itemsize)) // 128 * 128)
        return tr, min(tl, lanes)

    if rows <= pack:
        return rows, lanes                             # tiny input: one full block

    steps = max(8, pl.cdiv(rows * row_bytes, target))  # >= 8 steps for pipelining
    steps = min(steps, pl.cdiv(rows, pack))            # at least one packed tile/step
    if steps > 1 and steps % 2:
        steps = min(steps + 1, pl.cdiv(rows, pack))    # even count balances v7x's 2 TCs
    tr = pack * pl.cdiv(pl.cdiv(rows, steps), pack)
    return tr, lanes


def normalize_layer(x, means, sds):
    """(x - mu[c]) / sigma[c], broadcast over (H, W).  x: [B, C, H, W]."""
    B, C, H, W = x.shape
    rows = B * C
    L = H * W

    means_f32 = jnp.asarray(means, dtype=jnp.float32)
    sds_f32 = jnp.asarray(sds, dtype=jnp.float32)
    # Match the reference module's type promotion ((x - mu) / sigma with f32 stats).
    out_dtype = jnp.result_type(x.dtype, jnp.float32)

    # Lane-dense view; pad the lane axis to a multiple of 128 so stores are
    # unmasked even for small feature maps (e.g. 7x7 = 49).
    x_flat = x.reshape(rows, L)
    L_pad = pl.cdiv(L, 128) * 128
    if L_pad != L:
        x_flat = jnp.pad(x_flat, ((0, 0), (0, L_pad - L)))

    in_itemsize = jnp.dtype(x.dtype).itemsize
    out_itemsize = jnp.dtype(out_dtype).itemsize
    tr, tl = _choose_tiles(rows, L_pad, in_itemsize, out_itemsize)
    steps_r = pl.cdiv(rows, tr)
    steps_l = pl.cdiv(L_pad, tl)
    grid = (steps_r, steps_l)

    # Per-row affine params (row = (b, c) plane): scale = 1/sigma, bias = -mu/sigma.
    scale_c = 1.0 / sds_f32
    bias_c = -means_f32 / sds_f32
    scale = jnp.broadcast_to(scale_c[None, :], (B, C)).reshape(rows, 1)
    bias = jnp.broadcast_to(bias_c[None, :], (B, C)).reshape(rows, 1)
    rows_pad = steps_r * tr
    if rows_pad != rows:
        scale = jnp.pad(scale, ((0, rows_pad - rows), (0, 0)), constant_values=1.0)
        bias = jnp.pad(bias, ((0, rows_pad - rows), (0, 0)), constant_values=0.0)

    # Grid-resident scale/bias (fetched once, no per-step DMA descriptors);
    # fall back to per-step (tr, 1) blocks only if B*C is enormous and the
    # lane-padded resident columns would waste VMEM.
    resident = steps_r > 1 and rows_pad * 128 * 4 <= (2 << 20)
    if resident:
        param_spec = pl.BlockSpec((rows_pad, 1), lambda i, j: (0, 0))
    else:
        param_spec = pl.BlockSpec((tr, 1), lambda i, j: (i, 0))

    kernel = functools.partial(_normalize_kernel, tr=tr, resident=resident)

    out_flat = pl.pallas_call(
        kernel,
        out_shape=jax.ShapeDtypeStruct((rows, L_pad), out_dtype),
        grid=grid,
        in_specs=[
            param_spec,                                   # scale (rows, 1)
            param_spec,                                   # bias  (rows, 1)
            pl.BlockSpec((tr, tl), lambda i, j: (i, j)),  # x     (rows, L_pad)
        ],
        out_specs=pl.BlockSpec((tr, tl), lambda i, j: (i, j)),
        compiler_params=pltpu.CompilerParams(
            dimension_semantics=("parallel", "parallel"),
            vmem_limit_bytes=32 * 1024 * 1024,            # headroom over v5e's 16 MiB default
        ),
    )(scale, bias, x_flat)

    if L_pad != L:
        out_flat = out_flat[:, :L]
    return out_flat.reshape(B, C, H, W)


if __name__ == "__main__":
    key = jax.random.PRNGKey(0)
    B, C, H, W = 2, 4, 16, 16

    x = jax.random.normal(key, (B, C, H, W), dtype=jnp.float32)

    # Deterministic per-channel statistics (shapes per module __init__: (C,)).
    means = jnp.array([0.485, 0.456, 0.406, 0.5], dtype=jnp.float32)
    sds = jnp.array([0.229, 0.224, 0.225, 0.25], dtype=jnp.float32)

    out = normalize_layer(x, means, sds)
    out = jax.block_until_ready(out)

    # Reference check against plain-JAX broadcasting (same semantics as PyTorch).
    ref = (x - means[None, :, None, None]) / sds[None, :, None, None]
    assert out.shape == x.shape and out.dtype == x.dtype
    assert jnp.allclose(out, ref, rtol=1e-5, atol=1e-5)

    print("KERNEL_OK")
</pallas_src>

<mosaic_0001>
module attributes {stable_mosaic.version = 11 : i64} {
  func.func @_normalize_kernel(%arg0: i32, %arg1: i32, %arg2: memref<8x1xf32, #tpu.memory_space<vmem>>, %arg3: memref<8x1xf32, #tpu.memory_space<vmem>>, %arg4: memref<8x256xf32, #tpu.memory_space<vmem>>, %arg5: memref<8x256xf32, #tpu.memory_space<vmem>>) attributes {dimension_semantics = [#tpu.dimension_semantics<parallel>, #tpu.dimension_semantics<parallel>], iteration_bounds = array<i64: 1, 1>, scalar_prefetch = 0 : i64, scratch_operands = 0 : i64, tpu.core_type = #tpu.core_type<tc>, window_params = [{transform_indices = @transform_0, window_bounds = array<i64: 8, 1>}, {transform_indices = @transform_1, window_bounds = array<i64: 8, 1>}, {transform_indices = @transform_2, window_bounds = array<i64: 8, 256>}, {transform_indices = @transform_3, window_bounds = array<i64: 8, 256>}]} {
    %c0 = arith.constant 0 : index
    %c0_0 = arith.constant 0 : index
    %0 = vector.load %arg2[%c0, %c0_0] : memref<8x1xf32, #tpu.memory_space<vmem>>, vector<8x1xf32>
    %c0_1 = arith.constant 0 : index
    %c0_2 = arith.constant 0 : index
    %1 = vector.load %arg3[%c0_1, %c0_2] : memref<8x1xf32, #tpu.memory_space<vmem>>, vector<8x1xf32>
    %c0_3 = arith.constant 0 : index
    %c0_4 = arith.constant 0 : index
    %2 = vector.load %arg4[%c0_3, %c0_4] : memref<8x256xf32, #tpu.memory_space<vmem>>, vector<8x256xf32>
    %3 = vector.broadcast %0 : vector<8x1xf32> to vector<8x256xf32>
    %4 = arith.mulf %2, %3 : vector<8x256xf32>
    %5 = vector.broadcast %1 : vector<8x1xf32> to vector<8x256xf32>
    %6 = arith.addf %4, %5 : vector<8x256xf32>
    %c0_5 = arith.constant 0 : index
    %c0_6 = arith.constant 0 : index
    %7 = vector.load %arg5[%c0_5, %c0_6] : memref<8x256xf32, #tpu.memory_space<vmem>>, vector<8x256xf32>
    tpu.vector_store %arg5[%c0_5, %c0_6], %6 {strides = array<i32>} : memref<8x256xf32, #tpu.memory_space<vmem>>, vector<8x256xf32>,
    return
  }
  func.func @transform_0(%arg0: i32, %arg1: i32) -> (i32, i32) {
    %c0_i32 = arith.constant 0 : i32
    %c0_i32_0 = arith.constant 0 : i32
    return %arg0, %c0_i32 : i32, i32
  }
  func.func @transform_1(%arg0: i32, %arg1: i32) -> (i32, i32) {
    %c0_i32 = arith.constant 0 : i32
    %c0_i32_0 = arith.constant 0 : i32
    return %arg0, %c0_i32 : i32, i32
  }
  func.func @transform_2(%arg0: i32, %arg1: i32) -> (i32, i32) {
    %c0_i32 = arith.constant 0 : i32
    return %arg0, %arg1 : i32, i32
  }
  func.func @transform_3(%arg0: i32, %arg1: i32) -> (i32, i32) {
    %c0_i32 = arith.constant 0 : i32
    return %arg0, %arg1 : i32, i32
  }
}

</mosaic_0001>

<llo_original>
// kernel: tpu_custom_call.1
$region0: #{tpu_custom_call.1}
  #allocation0 [shape = 'u32[]', space=smem, size = 0x4, offset = 0x4, fixed_abs, tag = 'smem constant byte address 0x4 - core index']
  #allocation1 [shape = 'u32[144,128]{1,0:T(1,128)}', space=vmem, size = 0x12000, scoped, tag = 'internal scratch']
  %s0 = inlined_call_operand.vmem [shape: f32[8,1], index: 0, kind: input, shape index: {}]
  %s1 = inlined_call_operand.vmem [shape: f32[8,1], index: 1, kind: input, shape index: {}]
  %s2 = inlined_call_operand.vmem [shape: f32[8,256], index: 2, kind: input, shape index: {}]
  %s3 = inlined_call_operand.hbm [shape: f32[8,256], index: 3, kind: output, shape index: {}]
  %s4 = sld [smem:[#allocation0]]
  $region22: #{tpu_custom_call.1} parent=0
    _
  %s6 = ssub.s32 1, %s4
  %s7 = scalar_select 0, %s6, %s4
  $region1: #{tpu_custom_call.1} parent=0
    #allocation2 [shape = 'u8[8192]{0}', space=vmem, size = 0x2000, scoped, tag = 'output window, operand 0, single buffered']
    #allocation3 [shape = 's32[1]{0}', space=sflag, size = 0x4, scoped, tag = 'scoped memory for tpu_custom_call.1']
    %8 = vsyncpa [#allocation3], 0
    // Predicated region
    $region2: #{tpu_custom_call.1} parent=1 // pred_check
      _
    $region3: #{tpu_custom_call.1} parent=1 // pred_check_branch
      %10 = sbr.rel (0) target = $region5
    $region4: #{tpu_custom_call.1} parent=1 // pred_region
      _
    $region5: #{tpu_custom_call.1} parent=1 // pred_fallthru
      _
    // Predicated region
    $region6: #{tpu_custom_call.1} parent=1 // pred_check
      _
    $region7: #{tpu_custom_call.1} parent=1 // pred_check_branch
      %12 = sbr.rel (0) target = $region9
    $region8: #{tpu_custom_call.1} parent=1 // pred_region
      _
    $region9: #{tpu_custom_call.1} parent=1 // pred_fallthru
      _
    // Predicated region
    $region10: #{tpu_custom_call.1} parent=1 // pred_check
      _
    $region11: #{tpu_custom_call.1} parent=1 // pred_check_branch
      %14 = sbr.rel (0) target = $region13
    $region12: #{tpu_custom_call.1} parent=1 // pred_region
      _
    $region13: #{tpu_custom_call.1} parent=1 // pred_fallthru
      _
    %v15 = vld [vmem:[%s0] sm:$0xff]
    %v16 = vld [vmem:[%s1] sm:$0xff]
    %v17 = vld [vmem:[%s2] sm:$0xff]
    %v18 = vld [vmem:[%s2 + $0x8] sm:$0xff]
    %20 = vset.pattern.permute.xlu0 0
    %21 = vperm.xlu0 %20, %v15
    %v22 = vpop.permute.xlu0 %21
    %v24 = vmul.f32 %v17, %v22
    %v25 = vmul.f32 %v18, %v22
    %27 = vset.pattern.permute.xlu0 0
    %28 = vperm.xlu0 %27, %v16
    %v29 = vpop.permute.xlu0 %28
    %v31 = vadd.f32 %v24, %v29
    %v32 = vadd.f32 %v25, %v29
    %33 = vst [vmem:[#allocation2] sm:$0xff] %v31
    %34 = vst [vmem:[#allocation2 + $0x8] sm:$0xff] %v32
    // Predicated region
    $region14: #{tpu_custom_call.1} parent=1 // pred_check
      _
    $region15: #{tpu_custom_call.1} parent=1 // pred_check_branch
      %36 = sbr.rel (0) target = $region17
    $region16: #{tpu_custom_call.1} parent=1 // pred_region
      %s38 = ssub.s32 256, 256
      %39 = vsyncadd [#allocation3], %s38
      %s41 = sshll.u32 [#allocation2], 4
      %s42 = int_to_ptr.vmem [resolvable:$true] %s41
      %44 = dma.vmem_to_hbm [thread:$0]  %s42, 256, %s3, [#allocation3]
    $region17: #{tpu_custom_call.1} parent=1 // pred_fallthru
      _
    // Predicated region
    $region18: #{tpu_custom_call.1} parent=1 // pred_check
      _
    $region19: #{tpu_custom_call.1} parent=1 // pred_check_branch
      %46 = sbr.rel (0) target = $region21
    $region20: #{tpu_custom_call.1} parent=1 // pred_region
      %47 = dma.done [#allocation3], 256
    $region21: #{tpu_custom_call.1} parent=1 // pred_fallthru
      _
    %48 = vsyncpa [#allocation3], 1

</llo_original>
